<compile_context>
chip_gen: v7x
topology: tpu7x:2x2x1
jax: 0.10.0
libtpu: 0.0.40
codegen_flags: <defaults>
</compile_context>

<pallas_src>
from functools import partial

import jax
import jax.numpy as jnp
from jax.experimental import pallas as pl
from jax.experimental.pallas import tpu as pltpu


# --------------------------------------------------------------------------
# Block-size selection
# --------------------------------------------------------------------------
def _pick_block_batch(B, S, C, itemsize, target_bytes=4 << 20):
    """Largest divisor Bt of B with Bt*S*C*itemsize <= target, keeping >=2
    grid steps when B >= 2 (so both v7x TensorCores get work)."""
    per_elem = max(S * C * itemsize, 1)
    best = 1
    for d in range(1, B + 1):
        if B % d != 0:
            continue
        if d > 1 and d * per_elem > target_bytes:
            continue
        if B >= 2 and (B // d) < 2:
            continue
        best = max(best, d)
    return best


def _vmem_limit_bytes(block_bytes):
    # x block + y block, double-buffered, plus small stats/params + headroom.
    return int(min(64 << 20, max(16 << 20, 6 * block_bytes)))


# --------------------------------------------------------------------------
# Pallas kernels (one fused kernel per RevIN mode)
# --------------------------------------------------------------------------
def _revin_norm_kernel(*refs, eps, affine, subtract_last):
    if affine:
        x_ref, w_ref, b_ref, y_ref, stats_ref = refs
    else:
        x_ref, y_ref, stats_ref = refs

    x = x_ref[...].astype(jnp.float32)                       # (Bt, S, C)

    # statistics over the seq axis (two-pass; robust to large offsets)
    mean = jnp.mean(x, axis=1, keepdims=True)                # (Bt, 1, C)
    var = jnp.mean((x - mean) ** 2, axis=1, keepdims=True)   # unbiased=False
    stdev = jnp.sqrt(var + eps)                              # stored for denorm
    inv_std = jax.lax.rsqrt(var + eps)                       # EUP (free slot)

    if subtract_last:
        center = x[:, -1:, :]                                # x[:, -1, :].unsqueeze(1)
    else:
        center = mean

    # Fold (x - center)/stdev * w + b  ->  x * scale + shift
    if affine:
        w = w_ref[...].astype(jnp.float32).reshape(1, 1, -1)
        b = b_ref[...].astype(jnp.float32).reshape(1, 1, -1)
        scale = inv_std * w                                  # (Bt, 1, C)
        shift = b - center * scale
    else:
        scale = inv_std
        shift = -center * scale

    y_ref[...] = (x * scale + shift).astype(y_ref.dtype)
    stats_ref[...] = jnp.concatenate([center, stdev], axis=1).astype(stats_ref.dtype)


def _revin_denorm_kernel(*refs, eps, affine):
    if affine:
        x_ref, stats_ref, w_ref, b_ref, y_ref = refs
    else:
        x_ref, stats_ref, y_ref = refs

    x = x_ref[...].astype(jnp.float32)                       # (Bt, S, C)
    center = stats_ref[:, 0:1, :].astype(jnp.float32)        # (Bt, 1, C)
    stdev = stats_ref[:, 1:2, :].astype(jnp.float32)         # (Bt, 1, C)

    # Fold (x - b)/(w+eps^2) * stdev + center  ->  x * a + c
    if affine:
        w = w_ref[...].astype(jnp.float32).reshape(1, 1, -1)
        b = b_ref[...].astype(jnp.float32).reshape(1, 1, -1)
        a = stdev * (1.0 / (w + eps * eps))
        c = center - b * a
    else:
        a = stdev
        c = center

    y_ref[...] = (x * a + c).astype(y_ref.dtype)


# --------------------------------------------------------------------------
# Wrappers
# --------------------------------------------------------------------------
def revin_norm(x, weight=None, bias=None, *, eps=1e-5, affine=True,
               subtract_last=False):
    """x: (B, S, C) -> (y, stats) with stats (B, 2, C): [center; stdev]."""
    B, S, C = x.shape
    Bt = _pick_block_batch(B, S, C, x.dtype.itemsize)
    nb = B // Bt
    block_bytes = Bt * S * C * x.dtype.itemsize

    kernel = partial(_revin_norm_kernel, eps=eps, affine=affine,
                     subtract_last=subtract_last)

    in_specs = [pl.BlockSpec((Bt, S, C), lambda i: (i, 0, 0))]
    args = [x]
    if affine:
        in_specs += [pl.BlockSpec((1, C), lambda i: (0, 0)),
                     pl.BlockSpec((1, C), lambda i: (0, 0))]
        args += [weight, bias]

    y, stats = pl.pallas_call(
        kernel,
        out_shape=(
            jax.ShapeDtypeStruct((B, S, C), x.dtype),
            jax.ShapeDtypeStruct((B, 2, C), jnp.float32),
        ),
        grid=(nb,),
        in_specs=in_specs,
        out_specs=(
            pl.BlockSpec((Bt, S, C), lambda i: (i, 0, 0)),
            pl.BlockSpec((Bt, 2, C), lambda i: (i, 0, 0)),
        ),
        compiler_params=pltpu.CompilerParams(
            dimension_semantics=("parallel",),
            vmem_limit_bytes=_vmem_limit_bytes(block_bytes)),
    )(*args)
    return y, stats


def revin_denorm(x, stats, weight=None, bias=None, *, eps=1e-5, affine=True):
    """x: (B, S, C), stats: (B, 2, C) [center; stdev] -> (B, S, C)."""
    B, S, C = x.shape
    Bt = _pick_block_batch(B, S, C, x.dtype.itemsize)
    nb = B // Bt
    block_bytes = Bt * S * C * x.dtype.itemsize

    kernel = partial(_revin_denorm_kernel, eps=eps, affine=affine)

    in_specs = [pl.BlockSpec((Bt, S, C), lambda i: (i, 0, 0)),
                pl.BlockSpec((Bt, 2, C), lambda i: (i, 0, 0))]
    args = [x, stats]
    if affine:
        in_specs += [pl.BlockSpec((1, C), lambda i: (0, 0)),
                     pl.BlockSpec((1, C), lambda i: (0, 0))]
        args += [weight, bias]

    return pl.pallas_call(
        kernel,
        out_shape=jax.ShapeDtypeStruct((B, S, C), x.dtype),
        grid=(nb,),
        in_specs=in_specs,
        out_specs=pl.BlockSpec((Bt, S, C), lambda i: (i, 0, 0)),
        compiler_params=pltpu.CompilerParams(
            dimension_semantics=("parallel",),
            vmem_limit_bytes=_vmem_limit_bytes(block_bytes)),
    )(*args)


def revin_forward(x, params, mode, *, eps=1e-5, affine=True,
                  subtract_last=False, stats=None):
    """Mirror of RevIN.forward(x, mode). 'norm' returns (y, stats); 'denorm'
    consumes the stats from a prior 'norm' (explicit instead of module state)."""
    w = params.get("weight") if params else None
    b = params.get("bias") if params else None
    if mode == "norm":
        return revin_norm(x, w, b, eps=eps, affine=affine,
                          subtract_last=subtract_last)
    elif mode == "denorm":
        return revin_denorm(x, stats, w, b, eps=eps, affine=affine)
    else:
        raise NotImplementedError


# --------------------------------------------------------------------------
# Pure-JAX reference (for correctness check)
# --------------------------------------------------------------------------
def _ref_norm(x, w, b, eps, affine, subtract_last):
    mean = jnp.mean(x, axis=1, keepdims=True)
    var = jnp.mean((x - mean) ** 2, axis=1, keepdims=True)
    stdev = jnp.sqrt(var + eps)
    center = x[:, -1:, :] if subtract_last else mean
    y = (x - center) / stdev
    if affine:
        y = y * w + b
    return y, center, stdev


def _ref_denorm(x, center, stdev, w, b, eps, affine):
    if affine:
        x = (x - b) / (w + eps * eps)
    return x * stdev + center


# --------------------------------------------------------------------------
# Main
# --------------------------------------------------------------------------
if __name__ == "__main__":
    B, S, C = 2, 16, 128          # batch, seq_len, num_features (lane-dense C)
    EPS = 1e-5
    SUBTRACT_LAST = False

    key = jax.random.PRNGKey(0)
    kx, kw, kb = jax.random.split(key, 3)
    x = jax.random.normal(kx, (B, S, C), jnp.float32) * 3.0 + 1.5
    params = {
        "weight": 1.0 + 0.1 * jax.random.normal(kw, (1, C), jnp.float32),
        "bias": 0.1 * jax.random.normal(kb, (1, C), jnp.float32),
    }

    # ---- affine=True path (main check) ------------------------------------
    fwd = jax.jit(partial(revin_forward, mode="norm", eps=EPS,
                          affine=True, subtract_last=SUBTRACT_LAST))
    y_norm, stats = fwd(x, params)
    jax.block_until_ready(y_norm)

    bwd = jax.jit(lambda x_, p_, s_: revin_forward(
        x_, p_, "denorm", eps=EPS, affine=True, stats=s_))
    y_denorm = bwd(y_norm, params, stats)
    jax.block_until_ready(y_denorm)

    ry, rc, rs = _ref_norm(x, params["weight"][None], params["bias"][None],
                           EPS, True, SUBTRACT_LAST)
    rd = _ref_denorm(ry, rc, rs, params["weight"][None], params["bias"][None],
                     EPS, True)
    assert y_norm.shape == (B, S, C)
    assert stats.shape == (B, 2, C)
    assert jnp.allclose(y_norm, ry, rtol=1e-4, atol=1e-4)
    assert jnp.allclose(stats[:, 0:1, :], rc, rtol=1e-4, atol=1e-4)
    assert jnp.allclose(stats[:, 1:2, :], rs, rtol=1e-4, atol=1e-4)
    assert jnp.allclose(y_denorm, rd, rtol=1e-4, atol=1e-4)
    assert jnp.allclose(y_denorm, x, rtol=1e-3, atol=1e-3)   # round trip

    # ---- affine=False path (exercise the no-weight/bias specialization) ---
    y2, stats2 = jax.jit(partial(revin_forward, params=None, mode="norm",
                                 eps=EPS, affine=False,
                                 subtract_last=SUBTRACT_LAST))(x)
    y2_back = jax.jit(lambda x_, s_: revin_forward(
        x_, None, "denorm", eps=EPS, affine=False, stats=s_))(y2, stats2)
    jax.block_until_ready(y2_back)
    ry2, rc2, rs2 = _ref_norm(x, None, None, EPS, False, SUBTRACT_LAST)
    assert jnp.allclose(y2, ry2, rtol=1e-4, atol=1e-4)
    assert jnp.allclose(y2_back, x, rtol=1e-3, atol=1e-3)

    print("KERNEL_OK")
</pallas_src>

<mosaic_0001>
module attributes {stable_mosaic.version = 11 : i64} {
  func.func @_revin_norm_kernel(%arg0: i32, %arg1: memref<1x16x128xf32, #tpu.memory_space<vmem>>, %arg2: memref<1x128xf32, #tpu.memory_space<vmem>>, %arg3: memref<1x128xf32, #tpu.memory_space<vmem>>, %arg4: memref<1x16x128xf32, #tpu.memory_space<vmem>>, %arg5: memref<1x2x128xf32, #tpu.memory_space<vmem>>) attributes {dimension_semantics = [#tpu.dimension_semantics<parallel>], iteration_bounds = array<i64: 2>, scalar_prefetch = 0 : i64, scratch_operands = 0 : i64, tpu.core_type = #tpu.core_type<tc>, window_params = [{transform_indices = @transform_0, window_bounds = array<i64: 1, 16, 128>}, {pipeline_mode = #tpu.pipeline_mode<synchronous>, transform_indices = @transform_1, window_bounds = array<i64: 1, 128>}, {pipeline_mode = #tpu.pipeline_mode<synchronous>, transform_indices = @transform_2, window_bounds = array<i64: 1, 128>}, {transform_indices = @transform_3, window_bounds = array<i64: 1, 16, 128>}, {transform_indices = @transform_4, window_bounds = array<i64: 1, 2, 128>}]} {
    %c0 = arith.constant 0 : index
    %c0_0 = arith.constant 0 : index
    %c0_1 = arith.constant 0 : index
    %0 = vector.load %arg1[%c0, %c0_0, %c0_1] : memref<1x16x128xf32, #tpu.memory_space<vmem>>, vector<1x16x128xf32>
    %cst = arith.constant dense<0.000000e+00> : vector<1x128xf32>
    %1 = vector.multi_reduction <add>, %0, %cst [1] : vector<1x16x128xf32> to vector<1x128xf32>
    %2 = vector.shape_cast %1 : vector<1x128xf32> to vector<1x1x128xf32>
    %cst_2 = arith.constant 1.600000e+01 : f32
    %3 = vector.broadcast %cst_2 : f32 to vector<1x1x128xf32>
    %4 = arith.divf %2, %3 : vector<1x1x128xf32>
    %5 = vector.broadcast %4 : vector<1x1x128xf32> to vector<1x16x128xf32>
    %6 = arith.subf %0, %5 : vector<1x16x128xf32>
    %7 = arith.mulf %6, %6 : vector<1x16x128xf32>
    %cst_3 = arith.constant dense<0.000000e+00> : vector<1x128xf32>
    %8 = vector.multi_reduction <add>, %7, %cst_3 [1] : vector<1x16x128xf32> to vector<1x128xf32>
    %9 = vector.shape_cast %8 : vector<1x128xf32> to vector<1x1x128xf32>
    %cst_4 = arith.constant 1.600000e+01 : f32
    %10 = vector.broadcast %cst_4 : f32 to vector<1x1x128xf32>
    %11 = arith.divf %9, %10 : vector<1x1x128xf32>
    %cst_5 = arith.constant 9.99999974E-6 : f32
    %12 = vector.broadcast %cst_5 : f32 to vector<1x1x128xf32>
    %13 = arith.addf %11, %12 : vector<1x1x128xf32>
    %14 = math.sqrt %13 : vector<1x1x128xf32>
    %cst_6 = arith.constant 9.99999974E-6 : f32
    %15 = vector.broadcast %cst_6 : f32 to vector<1x1x128xf32>
    %16 = arith.addf %11, %15 : vector<1x1x128xf32>
    %17 = math.rsqrt %16 : vector<1x1x128xf32>
    %c0_7 = arith.constant 0 : index
    %c0_8 = arith.constant 0 : index
    %18 = vector.load %arg2[%c0_7, %c0_8] : memref<1x128xf32, #tpu.memory_space<vmem>>, vector<1x128xf32>
    %19 = vector.shape_cast %18 : vector<1x128xf32> to vector<1x1x128xf32>
    %c0_9 = arith.constant 0 : index
    %c0_10 = arith.constant 0 : index
    %20 = vector.load %arg3[%c0_9, %c0_10] : memref<1x128xf32, #tpu.memory_space<vmem>>, vector<1x128xf32>
    %21 = vector.shape_cast %20 : vector<1x128xf32> to vector<1x1x128xf32>
    %22 = arith.mulf %17, %19 : vector<1x1x128xf32>
    %23 = arith.mulf %4, %22 : vector<1x1x128xf32>
    %24 = arith.subf %21, %23 : vector<1x1x128xf32>
    %25 = vector.broadcast %22 : vector<1x1x128xf32> to vector<1x16x128xf32>
    %26 = arith.mulf %0, %25 : vector<1x16x128xf32>
    %27 = vector.broadcast %24 : vector<1x1x128xf32> to vector<1x16x128xf32>
    %28 = arith.addf %26, %27 : vector<1x16x128xf32>
    %c0_11 = arith.constant 0 : index
    %c0_12 = arith.constant 0 : index
    %c0_13 = arith.constant 0 : index
    %29 = vector.load %arg4[%c0_11, %c0_12, %c0_13] : memref<1x16x128xf32, #tpu.memory_space<vmem>>, vector<1x16x128xf32>
    tpu.vector_store %arg4[%c0_11, %c0_12, %c0_13], %28 {strides = array<i32>} : memref<1x16x128xf32, #tpu.memory_space<vmem>>, vector<1x16x128xf32>,
    %30 = tpu.concatenate %4, %14 in 1 : vector<1x1x128xf32>, vector<1x1x128xf32> -> vector<1x2x128xf32>
    %c0_14 = arith.constant 0 : index
    %c0_15 = arith.constant 0 : index
    %c0_16 = arith.constant 0 : index
    %31 = vector.load %arg5[%c0_14, %c0_15, %c0_16] : memref<1x2x128xf32, #tpu.memory_space<vmem>>, vector<1x2x128xf32>
    tpu.vector_store %arg5[%c0_14, %c0_15, %c0_16], %30 {strides = array<i32>} : memref<1x2x128xf32, #tpu.memory_space<vmem>>, vector<1x2x128xf32>,
    return
  }
  func.func @transform_0(%arg0: i32) -> (i32, i32, i32) {
    %c0_i32 = arith.constant 0 : i32
    %c0_i32_0 = arith.constant 0 : i32
    %c0_i32_1 = arith.constant 0 : i32
    return %arg0, %c0_i32, %c0_i32_0 : i32, i32, i32
  }
  func.func @transform_1(%arg0: i32) -> (i32, i32) {
    %c0_i32 = arith.constant 0 : i32
    %c0_i32_0 = arith.constant 0 : i32
    %c0_i32_1 = arith.constant 0 : i32
    return %c0_i32, %c0_i32_0 : i32, i32
  }
  func.func @transform_2(%arg0: i32) -> (i32, i32) {
    %c0_i32 = arith.constant 0 : i32
    %c0_i32_0 = arith.constant 0 : i32
    %c0_i32_1 = arith.constant 0 : i32
    return %c0_i32, %c0_i32_0 : i32, i32
  }
  func.func @transform_3(%arg0: i32) -> (i32, i32, i32) {
    %c0_i32 = arith.constant 0 : i32
    %c0_i32_0 = arith.constant 0 : i32
    %c0_i32_1 = arith.constant 0 : i32
    return %arg0, %c0_i32, %c0_i32_0 : i32, i32, i32
  }
  func.func @transform_4(%arg0: i32) -> (i32, i32, i32) {
    %c0_i32 = arith.constant 0 : i32
    %c0_i32_0 = arith.constant 0 : i32
    %c0_i32_1 = arith.constant 0 : i32
    return %arg0, %c0_i32, %c0_i32_0 : i32, i32, i32
  }
}

</mosaic_0001>

<llo_original>
// kernel: revin_forward.1
$region0: #{revin_forward.1}
  #allocation0 [shape = 'u32[]', space=smem, size = 0x4, offset = 0x4, fixed_abs, tag = 'smem constant byte address 0x4 - core index']
  #allocation1 [shape = 'u32[144,128]{1,0:T(1,128)}', space=vmem, size = 0x12000, scoped, tag = 'internal scratch']
  %s0 = inlined_call_operand.hbm [shape: f32[2,16,128], index: 0, kind: input, shape index: {}]
  %s1 = inlined_call_operand.vmem [shape: f32[1,128], index: 1, kind: input, shape index: {}]
  %s2 = inlined_call_operand.vmem [shape: f32[1,128], index: 2, kind: input, shape index: {}]
  %s3 = inlined_call_operand.hbm [shape: f32[2,16,128], index: 3, kind: output, shape index: {0}]
  %s4 = inlined_call_operand.hbm [shape: f32[2,2,128], index: 4, kind: output, shape index: {1}]
  %5 = xla_tuple %s3, %s4
  %s6 = sld [smem:[#allocation0]]
  $region57: #{revin_forward.1} parent=0
    _
  %s8 = ssub.s32 1, %s6
  %s9 = scalar_select 0, %s8, %s6
  $region1: #{revin_forward.1} parent=0
    #allocation2 [shape = 'u8[16384]{0}', space=vmem, size = 0x4000, scoped, tag = 'input window, operand 0']
    #allocation3 [shape = 's32[2]{0}', space=sflag, size = 0x8, scoped, tag = 'scoped memory for revin_forward.1']
    #allocation4 [shape = 's32[2]{0}', space=sflag, size = 0x8, scoped, tag = 'scoped memory for revin_forward.1']
    #allocation5 [shape = 'u8[16384]{0}', space=vmem, size = 0x4000, scoped, tag = 'output window, operand 0']
    #allocation6 [shape = 'u8[2048]{0}', space=vmem, size = 0x800, scoped, tag = 'output window, operand 1']
    #allocation7 [shape = 's32[2]{0}', space=sflag, size = 0x8, scoped, tag = 'scoped memory for revin_forward.1']
    %10 = vsyncpa [#allocation3], 0
    %s11 = scalar_lea.sflag [#allocation3], 1
    %12 = vsyncpa %s11, 0
    %13 = vsyncpa [#allocation4], 0
    %s14 = scalar_lea.sflag [#allocation4], 1
    %15 = vsyncpa %s14, 0
    %16 = vsyncpa [#allocation7], 0
    %s17 = scalar_lea.sflag [#allocation7], 1
    %18 = vsyncpa %s17, 0
    loop: start=0, step=1, limit=4
    $region2: #{revin_forward.1} parent=1 // loop_pre_header
      _
    $region3: #{revin_forward.1} parent=1 // loop_header
      %s20 = sphi 0, %s24
      %p21 = scmp.ge.s32.totalorder %s20, 4
      %s30 = sphi 0, %s32
      %s33 = sphi 0, %s30
      %s34 = sphi 0, %s33
      %s50 = sphi 0, %s34
      %s54 = sphi 0, %s54
      %s56 = sphi 0, %s54
      %s57 = sphi 0, %s56
      %s71 = sphi 0, %s57
      %s75 = sphi 0, %s75
      %s77 = sphi 0, %s75
      %s78 = sphi 0, %s77
      %s92 = sphi 0, %s78
      %s98 = sphi 0, %s100
      %s101 = sphi 0, %s98
      %s102 = sphi 0, %s101
      %s118 = sphi 0, %s102
      %s124 = sphi 0, %s126
      %s127 = sphi 0, %s124
      %s128 = sphi 0, %s127
      %s144 = sphi 0, %s128
    $region4: #{revin_forward.1} parent=1 // loop_header_branch
      %23 = sbr.rel (%p21) target = $region8
    $region5: #{revin_forward.1} parent=1 // loop_body
      %s25 = ssub.s32 %s20, 1
      %s26 = ssub.s32 %s20, 2
      %s27 = sadd.s32 %s20, 1
      %s28 = ssub.s32 %s20, %s27
      %p29 = scmp.eq.s32.totalorder %s28, 0
      %s31 = sadd.s32 %s30, 1
      %s32 = scalar_select %p29, %s30, %s31
      %p35 = pneg %p29
      %p36 = scmp.eq.s32.totalorder %s20, 1
      %p37 = por %p35, %p36
      %p38 = scmp.ne.s32.totalorder %s30, %s33
      %p39 = scmp.eq.s32.totalorder %s20, 0
      %p40 = por %p38, %p39
      %p41 = scmp.ne.s32.totalorder %s30, %s33
      %p42 = scmp.eq.s32.totalorder %s25, 1
      %p43 = por %p41, %p42
      %p44 = scmp.ne.s32.totalorder %s33, %s34
      %p45 = scmp.eq.s32.totalorder %s25, 0
      %p46 = por %p44, %p45
      %p47 = scmp.ne.s32.totalorder %s33, %s34
      %p48 = scmp.eq.s32.totalorder %s26, 1
      %p49 = por %p47, %p48
      %p51 = scmp.ne.s32.totalorder %s34, %s50
      %p52 = scmp.eq.s32.totalorder %s26, 0
      %p53 = por %p51, %p52
      %s55 = sadd.s32 %s54, 1
      %p58 = scmp.eq.s32.totalorder %s20, 1
      %p59 = scmp.ne.s32.totalorder %s54, %s56
      %p60 = scmp.eq.s32.totalorder %s20, 0
      %p61 = por %p59, %p60
      %p62 = scmp.ne.s32.totalorder %s54, %s56
      %p63 = scmp.eq.s32.totalorder %s25, 1
      %p64 = por %p62, %p63
      %p65 = scmp.ne.s32.totalorder %s56, %s57
      %p66 = scmp.eq.s32.totalorder %s25, 0
      %p67 = por %p65, %p66
      %p68 = scmp.ne.s32.totalorder %s56, %s57
      %p69 = scmp.eq.s32.totalorder %s26, 1
      %p70 = por %p68, %p69
      %p72 = scmp.ne.s32.totalorder %s57, %s71
      %p73 = scmp.eq.s32.totalorder %s26, 0
      %p74 = por %p72, %p73
      %s76 = sadd.s32 %s75, 1
      %p79 = scmp.eq.s32.totalorder %s20, 1
      %p80 = scmp.ne.s32.totalorder %s75, %s77
      %p81 = scmp.eq.s32.totalorder %s20, 0
      %p82 = por %p80, %p81
      %p83 = scmp.ne.s32.totalorder %s75, %s77
      %p84 = scmp.eq.s32.totalorder %s25, 1
      %p85 = por %p83, %p84
      %p86 = scmp.ne.s32.totalorder %s77, %s78
      %p87 = scmp.eq.s32.totalorder %s25, 0
      %p88 = por %p86, %p87
      %p89 = scmp.ne.s32.totalorder %s77, %s78
      %p90 = scmp.eq.s32.totalorder %s26, 1
      %p91 = por %p89, %p90
      %p93 = scmp.ne.s32.totalorder %s78, %s92
      %p94 = scmp.eq.s32.totalorder %s26, 0
      %p95 = por %p93, %p94
      %s96 = ssub.s32 %s20, %s27
      %p97 = scmp.eq.s32.totalorder %s96, 0
      %s99 = sadd.s32 %s98, 1
      %s100 = scalar_select %p97, %s98, %s99
      %p103 = pneg %p97
      %p104 = scmp.eq.s32.totalorder %s20, 1
      %p105 = por %p103, %p104
      %p106 = scmp.ne.s32.totalorder %s98, %s101
      %p107 = scmp.eq.s32.totalorder %s20, 0
      %p108 = por %p106, %p107
      %p109 = scmp.ne.s32.totalorder %s98, %s101
      %p110 = scmp.eq.s32.totalorder %s25, 1
      %p111 = por %p109, %p110
      %p112 = scmp.ne.s32.totalorder %s101, %s102
      %p113 = scmp.eq.s32.totalorder %s25, 0
      %p114 = por %p112, %p113
      %p115 = scmp.ne.s32.totalorder %s101, %s102
      %p116 = scmp.eq.s32.totalorder %s26, 1
      %p117 = por %p115, %p116
      %p119 = scmp.ne.s32.totalorder %s102, %s118
      %p120 = scmp.eq.s32.totalorder %s26, 0
      %p121 = por %p119, %p120
      %s122 = ssub.s32 %s20, %s27
      %p123 = scmp.eq.s32.totalorder %s122, 0
      %s125 = sadd.s32 %s124, 1
      %s126 = scalar_select %p123, %s124, %s125
      %p129 = pneg %p123
      %p130 = scmp.eq.s32.totalorder %s20, 1
      %p131 = por %p129, %p130
      %p132 = scmp.ne.s32.totalorder %s124, %s127
      %p133 = scmp.eq.s32.totalorder %s20, 0
      %p134 = por %p132, %p133
      %p135 = scmp.ne.s32.totalorder %s124, %s127
      %p136 = scmp.eq.s32.totalorder %s25, 1
      %p137 = por %p135, %p136
      %p138 = scmp.ne.s32.totalorder %s127, %s128
      %p139 = scmp.eq.s32.totalorder %s25, 0
      %p140 = por %p138, %p139
      %p141 = scmp.ne.s32.totalorder %s127, %s128
      %p142 = scmp.eq.s32.totalorder %s26, 1
      %p143 = por %p141, %p142
      %p145 = scmp.ne.s32.totalorder %s128, %s144
      %p146 = scmp.eq.s32.totalorder %s26, 0
      %p147 = por %p145, %p146
      %p148 = scmp.le.s32.totalorder 1, %s20
      %p149 = scmp.lt.s32.totalorder %s20, 3
      %p150 = pnand %p148, %p149
      %p151 = pneg %p150
      // Predicated region
      $region9: #{revin_forward.1} parent=5 // pred_check
        _
      $region10: #{revin_forward.1} parent=5 // pred_check_branch
        %153 = sbr.rel (%p150) target = $region12
      $region11: #{revin_forward.1} parent=5 // pred_region
        %s154 = ssub.s32 %s20, 1
        // Predicated region
        $region13: #{revin_forward.1} parent=11 // pred_check
          %p155 = pneg %p67
        $region14: #{revin_forward.1} parent=11 // pred_check_branch
          %157 = sbr.rel (%p155) target = $region16
        $region15: #{revin_forward.1} parent=11 // pred_region
          _
        $region16: #{revin_forward.1} parent=11 // pred_fallthru
          _
        // Predicated region
        $region17: #{revin_forward.1} parent=11 // pred_check
          %p158 = pneg %p88
        $region18: #{revin_forward.1} parent=11 // pred_check_branch
          %160 = sbr.rel (%p158) target = $region20
        $region19: #{revin_forward.1} parent=11 // pred_region
          _
        $region20: #{revin_forward.1} parent=11 // pred_fallthru
          _
      $region12: #{revin_forward.1} parent=5 // pred_fallthru
        _
      %p161 = scmp.lt.s32.totalorder %s20, 2
      // Predicated region
      $region21: #{revin_forward.1} parent=5 // pred_check
        %p162 = pneg %p161
      $region22: #{revin_forward.1} parent=5 // pred_check_branch
        %164 = sbr.rel (%p162) target = $region24
      $region23: #{revin_forward.1} parent=5 // pred_region
        // Predicated region
        $region25: #{revin_forward.1} parent=23 // pred_check
          %p165 = pneg %p40
        $region26: #{revin_forward.1} parent=23 // pred_check_branch
          %167 = sbr.rel (%p165) target = $region28
        $region27: #{revin_forward.1} parent=23 // pred_region
          %s168 = sand.u32 %s30, 1
          %s169 = scalar_lea.sflag [#allocation3], %s168
          %s170 = sand.u32 %s30, 1
          %s171 = smul.addr %s170, 16
          %s172 = scalar_lea.vmem [#allocation2], %s171
          %s174 = ssub.s32 256, 256
          %175 = vsyncadd %s169, %s174
          %s176 = smul.addr %s20, 2
          %s177 = smul.addr %s176, 128
          %s178 = scalar_lea.hbm %s0, %s177
          %s179 = sshll.u32 %s172, 4
          %s180 = int_to_ptr.vmem [resolvable:$true] %s179
          %185 = dma.hbm_to_vmem [thread:$0]  %s178, 256, %s180, %s169, 128, 128, 8
        $region28: #{revin_forward.1} parent=23 // pred_fallthru
          _
      $region24: #{revin_forward.1} parent=5 // pred_fallthru
        _
      %p186 = scmp.le.s32.totalorder 1, %s20
      %p187 = scmp.lt.s32.totalorder %s20, 3
      %p188 = pnand %p186, %p187
      %p189 = pneg %p188
      // Predicated region
      $region29: #{revin_forward.1} parent=5 // pred_check
        _
      $region30: #{revin_forward.1} parent=5 // pred_check_branch
        %191 = sbr.rel (%p188) target = $region32
      $region31: #{revin_forward.1} parent=5 // pred_region
        %s192 = ssub.s32 %s20, 1
        %s193 = sand.u32 %s33, 1
        %s194 = scalar_lea.sflag [#allocation3], %s193
        %s195 = sand.u32 %s33, 1
        %s196 = smul.addr %s195, 16
        %s197 = scalar_lea.vmem [#allocation2], %s196
        // Predicated region
        $region33: #{revin_forward.1} parent=31 // pred_check
          %p198 = pneg %p46
        $region34: #{revin_forward.1} parent=31 // pred_check_branch
          %200 = sbr.rel (%p198) target = $region36
        $region35: #{revin_forward.1} parent=31 // pred_region
          %201 = dma.done %s194, 256
        $region36: #{revin_forward.1} parent=31 // pred_fallthru
          _
        %s202 = sand.u32 %s33, 1
        %s203 = scalar_lea.sflag [#allocation3], %s202
        %s204 = sand.u32 %s33, 1
        %s205 = smul.addr %s204, 16
        %s206 = scalar_lea.vmem [#allocation2], %s205
        %p207 = pneg %p46
        %p208 = pneg %p43
        %p209 = pneg %p67
        %p210 = pneg %p64
        %p211 = pneg %p88
        %p212 = pneg %p85
        %p213 = pneg %p114
        %p214 = pneg %p111
        %s215 = sand.u32 %s101, 1
        %s216 = scalar_lea.sflag [#allocation4], %s215
        %s217 = sand.u32 %s101, 1
        %s218 = smul.addr %s217, 16
        %s219 = scalar_lea.vmem [#allocation5], %s218
        %p220 = pneg %p140
        %p221 = pneg %p137
        %s222 = sand.u32 %s127, 1
        %s223 = scalar_lea.sflag [#allocation7], %s222
        %s224 = sand.u32 %s127, 1
        %s225 = smul.addr %s224, 2
        %s226 = scalar_lea.vmem [#allocation6], %s225
        %v227 = vld [vmem:[%s197] sm:$0xff]
        %v228 = vld [vmem:[%s197 + $0x8] sm:$0xff]
        %v229 = vadd.f32 %v227, %v228
        %v230 = vrot.slane %v229, 4
        %v231 = vadd.f32 %v229, %v230
        %v232 = vrot.slane %v231, 2
        %v233 = vadd.f32 %v231, %v232
        %v234 = vrot.slane %v233, 1
        %v235 = vadd.f32 %v233, %v234
        %v236 = vrcp.pop 16.0
        %v237 = vmul.f32 %v235, %v236
        %v238 = vsub.f32 %v227, %v237
        %v239 = vsub.f32 %v228, %v237
        %v240 = vmul.f32 %v238, %v238
        %v241 = vmul.f32 %v239, %v239
        %v242 = vadd.f32 %v240, %v241
        %v243 = vrot.slane %v242, 4
        %v244 = vadd.f32 %v242, %v243
        %v245 = vrot.slane %v244, 2
        %v246 = vadd.f32 %v244, %v245
        %v247 = vrot.slane %v246, 1
        %v248 = vadd.f32 %v246, %v247
        %v249 = vmul.f32 %v248, %v236
        %v250 = vadd.f32 %v249, 1e-05
        %v251 = vrsqrt.pop %v250
        %v252 = vmul.f32 %v250, %v251
        %vm253 = vcmp.eq.f32.partialorder %v250, inf
        %v254 = vsel %vm253, %v250, %v252
        %vm255 = vcmp.eq.f32.partialorder %v250, 0.0
        %v256 = vand.u32 %v250, 2147483648
        %v257 = vsel %vm255, %v256, %v254
        %v258 = vrsqrt.pop %v250
        %v259 = vld [vmem:[%s1] sm:$0x1]
        %v260 = vld [vmem:[%s2] sm:$0x1]
        %v261 = vmul.f32 %v258, %v259
        %v262 = vmul.f32 %v237, %v261
        %v263 = vsub.f32 %v260, %v262
        %v264 = vlaneseq
        %v265 = vshrl.u32 %v264, 7
        %v266 = vsub.s32 0, %v265
        %v267 = vrot.slane %v261, %v266
        %v268 = vmul.f32 %v227, %v267
        %v269 = vmul.f32 %v228, %v267
        %v271 = vlaneseq
        %v272 = vshrl.u32 %v271, 7
        %v273 = vsub.s32 0, %v272
        %v274 = vrot.slane %v263, %v273
        %v276 = vadd.f32 %v268, %v274
        %v277 = vadd.f32 %v269, %v274
        %278 = vst [vmem:[%s219] sm:$0xff] %v276
        %279 = vst [vmem:[%s219 + $0x8] sm:$0xff] %v277
        %vm280 = vcmask 1040384
        %v281 = vsel %vm280, %v237, %v257
        %282 = vst [vmem:[%s226] sm:$0x3] %v281
        %s283 = sand.u32 %s101, 1
        %s284 = scalar_lea.sflag [#allocation4], %s283
        %s285 = sand.u32 %s101, 1
        %s286 = smul.addr %s285, 16
        %s287 = scalar_lea.vmem [#allocation5], %s286
        %s288 = sand.u32 %s127, 1
        %s289 = scalar_lea.sflag [#allocation7], %s288
        %s290 = sand.u32 %s127, 1
        %s291 = smul.addr %s290, 2
        %s292 = scalar_lea.vmem [#allocation6], %s291
        // Predicated region
        $region37: #{revin_forward.1} parent=31 // pred_check
          %p293 = pneg %p111
        $region38: #{revin_forward.1} parent=31 // pred_check_branch
          %295 = sbr.rel (%p293) target = $region40
        $region39: #{revin_forward.1} parent=31 // pred_region
          %s297 = ssub.s32 256, 256
          %298 = vsyncadd %s284, %s297
          %s299 = smul.addr %s25, 2
          %s300 = smul.addr %s299, 128
          %s301 = scalar_lea.hbm %s3, %s300
          %s302 = sshll.u32 %s287, 4
          %s303 = int_to_ptr.vmem [resolvable:$true] %s302
          %308 = dma.vmem_to_hbm [thread:$0]  %s303, 256, %s301, %s284, 128, 128, 8
        $region40: #{revin_forward.1} parent=31 // pred_fallthru
          _
        // Predicated region
        $region41: #{revin_forward.1} parent=31 // pred_check
          %p309 = pneg %p137
        $region42: #{revin_forward.1} parent=31 // pred_check_branch
          %311 = sbr.rel (%p309) target = $region44
        $region43: #{revin_forward.1} parent=31 // pred_region
          %s313 = ssub.s32 32, 32
          %314 = vsyncadd %s289, %s313
          %s315 = smul.addr %s25, 32
          %s316 = scalar_lea.hbm %s4, %s315
          %s318 = sshll.u32 %s292, 4
          %s319 = int_to_ptr.vmem [resolvable:$true] %s318
          %321 = dma.vmem_to_hbm [thread:$0]  %s319, 32, %s316, %s289
        $region44: #{revin_forward.1} parent=31 // pred_fallthru
          _
      $region32: #{revin_forward.1} parent=5 // pred_fallthru
        _
      %p322 = scmp.le.s32.totalorder 2, %s20
      // Predicated region
      $region45: #{revin_forward.1} parent=5 // pred_check
        %p323 = pneg %p322
      $region46: #{revin_forward.1} parent=5 // pred_check_branch
        %325 = sbr.rel (%p323) target = $region48
      $region47: #{revin_forward.1} parent=5 // pred_region
        %s326 = ssub.s32 %s20, 2
        // Predicated region
        $region49: #{revin_forward.1} parent=47 // pred_check
          %p327 = pneg %p117
        $region50: #{revin_forward.1} parent=47 // pred_check_branch
          %329 = sbr.rel (%p327) target = $region52
        $region51: #{revin_forward.1} parent=47 // pred_region
          %s330 = sand.u32 %s102, 1
          %s331 = scalar_lea.sflag [#allocation4], %s330
          %s332 = sand.u32 %s102, 1
          %s333 = smul.addr %s332, 16
          %s334 = scalar_lea.vmem [#allocation5], %s333
          %335 = dma.done %s331, 256
        $region52: #{revin_forward.1} parent=47 // pred_fallthru
          _
        // Predicated region
        $region53: #{revin_forward.1} parent=47 // pred_check
          %p336 = pneg %p143
        $region54: #{revin_forward.1} parent=47 // pred_check_branch
          %338 = sbr.rel (%p336) target = $region56
        $region55: #{revin_forward.1} parent=47 // pred_region
          %s339 = sand.u32 %s128, 1
          %s340 = scalar_lea.sflag [#allocation7], %s339
          %s341 = sand.u32 %s128, 1
          %s342 = smul.addr %s341, 2
          %s343 = scalar_lea.vmem [#allocation6], %s342
          %344 = dma.done %s340, 32
        $region56: #{revin_forward.1} parent=47 // pred_fallthru
          _
      $region48: #{revin_forward.1} parent=5 // pred_fallthru
        _
    $region6: #{revin_forward.1} parent=1 // loop_footer
      %s24 = sadd.s32 1, %s20
    $region7: #{revin_forward.1} parent=1 // loop_footer_branch
      %19 = sbr.rel target = $region3
    $region8: #{revin_forward.1} parent=1 // loop_exit
      _
    %345 = vsyncpa [#allocation3], 1
    %s346 = scalar_lea.sflag [#allocation3], 1
    %347 = vsyncpa %s346, 1
    %348 = vsyncpa [#allocation4], 1
    %s349 = scalar_lea.sflag [#allocation4], 1
    %350 = vsyncpa %s349, 1
    %351 = vsyncpa [#allocation7], 1
    %s352 = scalar_lea.sflag [#allocation7], 1
    %353 = vsyncpa %s352, 1

</llo_original>
